<compile_context>
chip_gen: v7x
topology: tpu7x:2x2x1
jax: 0.10.0
libtpu: 0.0.40
codegen_flags: <defaults>
</compile_context>

<pallas_src>
import jax
import jax.numpy as jnp
from jax import lax
from jax.experimental import pallas as pl
from jax.experimental.pallas import tpu as pltpu


# ----------------------------------------------------------------------------------------
# Fused conv(3x3, pad=1) -> maxpool(2x2, stride 2, floor) -> relu kernel.
# One (image, row-block) pair per grid step; ONE MXU dot per step.
# ----------------------------------------------------------------------------------------
def _conv_pool_relu_kernel(Cout):
    def kernel(x_ref, w_ref, b_ref, o_ref):
        # x_ref : (1, 1, K, R) bf16   4x4-tap im2col, K = 16*Cin, R = rows_per_block * Wp
        # w_ref : (4*Cout, K)  bf16   stacked weights, row group g in {0..3} = pooling
        #                             parity (row, col) = (g//2, g%2)
        # b_ref : (Cout, 1)    f32
        # o_ref : (1, 1, Cout, R) f32 pooled + bias + relu activations (pixels lane-dense)
        x = x_ref[0, 0, :, :]
        w = w_ref[...]
        y = jnp.dot(w, x, preferred_element_type=jnp.float32)            # (4*Cout, R)
        # 2x2 max-pool = elementwise max over the 4 parity groups (sublane slices).
        y = jnp.maximum(jnp.maximum(y[:Cout, :], y[Cout:2 * Cout, :]),
                        jnp.maximum(y[2 * Cout:3 * Cout, :], y[3 * Cout:, :]))
        y = jnp.maximum(y + b_ref[...], 0.0)                             # bias (after max) + relu
        o_ref[0, 0, :, :] = y.astype(o_ref.dtype)

    return kernel


def conv_pool_relu(x_nchw, w_oihw, b, *, rows_per_block):
    """3x3 conv (pad 1) -> 2x2 max-pool (floor) -> relu.

    x_nchw : (B, Cin, H, W) float32
    Returns (B, nblk, Cout, rows_per_block * Wp), last axis = (pooled_row_in_block,
    pooled_col) flattened; pooled_row = block_idx * rows_per_block + row_in_block.
    """
    B, Cin, H, W = x_nchw.shape
    Cout = w_oihw.shape[0]
    Hp, Wp = H // 2, W // 2
    assert Hp % rows_per_block == 0, (Hp, rows_per_block)
    nblk = Hp // rows_per_block
    R = rows_per_block * Wp
    K = 16 * Cin

    xp = jnp.pad(x_nchw.astype(jnp.float32), ((0, 0), (0, 0), (1, 1), (1, 1)))

    # Single 4x4-tap im2col: tap (kh, kw) for pooled pixel (p, q) is xp[2p+kh, 2q+kw].
    # k-index ordering: k = (kh*4 + kw)*Cin + ci.
    taps = []
    for kh in range(4):
        for kw in range(4):
            t = xp[:, :, kh: kh + 2 * Hp: 2, kw: kw + 2 * Wp: 2]
            taps.append(t)                                   # (B, Cin, Hp, Wp)
    col = jnp.concatenate(taps, axis=1)                      # (B, K, Hp, Wp)
    col = (col.reshape(B, K, nblk, R)                        # split rows into blocks
              .transpose(0, 2, 1, 3)                         # (B, nblk, K, R)
              .astype(jnp.bfloat16))

    # Stacked weights: 4 groups of Cout filters, one per (row, col) pooling parity.
    # conv output at (2p+a, 2q+c) uses taps (kh=a+dh, kw=c+dw), dh,dw in 0..2.
    wt = jnp.transpose(w_oihw.astype(jnp.float32), (2, 3, 1, 0))   # (dh, dw, Cin, Cout)
    w4 = jnp.zeros((4, 4, Cin, 4 * Cout), jnp.float32)
    w4 = w4.at[0:3, 0:3, :, 0 * Cout:1 * Cout].set(wt)             # a=0, c=0
    w4 = w4.at[0:3, 1:4, :, 1 * Cout:2 * Cout].set(wt)             # a=0, c=1
    w4 = w4.at[1:4, 0:3, :, 2 * Cout:3 * Cout].set(wt)             # a=1, c=0
    w4 = w4.at[1:4, 1:4, :, 3 * Cout:4 * Cout].set(wt)             # a=1, c=1
    w_stk = w4.reshape(K, 4 * Cout).T.astype(jnp.bfloat16)         # (4*Cout, K)
    b2 = b.reshape(Cout, 1).astype(jnp.float32)

    return pl.pallas_call(
        _conv_pool_relu_kernel(Cout),
        out_shape=jax.ShapeDtypeStruct((B, nblk, Cout, R), jnp.float32),
        grid_spec=pltpu.PrefetchScalarGridSpec(
            num_scalar_prefetch=0,
            grid=(B, nblk),
            in_specs=[
                pl.BlockSpec((1, 1, K, R), lambda bi, rb: (bi, rb, 0, 0)),
                pl.BlockSpec((4 * Cout, K), lambda bi, rb: (0, 0)),
                pl.BlockSpec((Cout, 1), lambda bi, rb: (0, 0)),
            ],
            out_specs=pl.BlockSpec((1, 1, Cout, R), lambda bi, rb: (bi, rb, 0, 0)),
        ),
        compiler_params=pltpu.CompilerParams(
            # Both grid axes are independent (no cross-step accumulation): lets the two
            # TensorCores on v7x split the (batch, row-block) work. No-op on v5e/v6e.
            dimension_semantics=("parallel", "parallel"),
            vmem_limit_bytes=32 * 1024 * 1024,
        ),
    )(col, w_stk, b2)


def _blocks_to_nchw(y, Hp, Wp):
    """(B, nblk, C, rows*Wp) kernel output -> (B, C, Hp, Wp) NCHW activation."""
    B, nblk, C, R = y.shape
    rows = Hp // nblk
    return (y.reshape(B, nblk, C, rows, Wp)
             .transpose(0, 2, 1, 3, 4)
             .reshape(B, C, Hp, Wp))


# ----------------------------------------------------------------------------------------
# Fused fc1 -> relu -> fc2 kernel: single grid step, whole problem resident in VMEM.
# fc1 weight is consumed in its native (hidden, K) layout (lane-dense, no transpose/pad);
# the contraction is a trans-B matmul via lax.dot_general.
# ----------------------------------------------------------------------------------------
def _fc_kernel(x_ref, w1_ref, b1_ref, w2_ref, b2_ref, o_ref):
    # x_ref  : (B, K)        bf16
    # w1_ref : (hidden, K)   bf16   native nn.Linear layout
    # w2_ref : (hidden, nout) f32
    h = lax.dot_general(x_ref[...], w1_ref[...],
                        dimension_numbers=(((1,), (1,)), ((), ())),
                        preferred_element_type=jnp.float32)               # (B, hidden)
    h = jnp.maximum(h + b1_ref[...], 0.0)
    out = jnp.dot(h, w2_ref[...], preferred_element_type=jnp.float32) + b2_ref[...]
    o_ref[...] = out.astype(o_ref.dtype)


def mlp_head(x_flat_bf16, w1_hk, b1, w2_ho, b2):
    B, K = x_flat_bf16.shape
    hidden = w1_hk.shape[0]
    n_out = w2_ho.shape[1]
    b1_2 = b1.reshape(1, hidden).astype(jnp.float32)
    b2_2 = b2.reshape(1, n_out).astype(jnp.float32)

    return pl.pallas_call(
        _fc_kernel,
        out_shape=jax.ShapeDtypeStruct((B, n_out), jnp.float32),
        grid_spec=pltpu.PrefetchScalarGridSpec(
            num_scalar_prefetch=0,
            grid=(1,),
            in_specs=[
                pl.BlockSpec((B, K), lambda k: (0, 0)),
                pl.BlockSpec((hidden, K), lambda k: (0, 0)),
                pl.BlockSpec((1, hidden), lambda k: (0, 0)),
                pl.BlockSpec((hidden, n_out), lambda k: (0, 0)),
                pl.BlockSpec((1, n_out), lambda k: (0, 0)),
            ],
            out_specs=pl.BlockSpec((B, n_out), lambda k: (0, 0)),
        ),
        compiler_params=pltpu.CompilerParams(
            dimension_semantics=("arbitrary",),
            vmem_limit_bytes=32 * 1024 * 1024,
        ),
    )(x_flat_bf16, w1_hk.astype(jnp.bfloat16), b1_2,
      w2_ho.astype(jnp.float32), b2_2)


# ----------------------------------------------------------------------------------------
# Full forward pass (Pallas kernels) and a pure-JAX reference mirroring the PyTorch module.
# ----------------------------------------------------------------------------------------
def symbol_cnn_forward(x_nchw, params):
    x = x_nchw.astype(jnp.float32)
    B, _, H, W = x.shape

    # conv1: 150x150 -> pooled 75x75; 3 row blocks of 25 pooled rows each (grid (B, 3)).
    y1 = conv_pool_relu(x, params["conv1_w"], params["conv1_b"], rows_per_block=25)
    x2 = _blocks_to_nchw(y1, H // 2, W // 2)                              # (B, 16, 75, 75)

    # conv2: 75x75 -> pooled 37x37; 37 is prime -> whole image per grid step (grid (B, 1)).
    y2 = conv_pool_relu(x2, params["conv2_w"], params["conv2_b"], rows_per_block=37)
    x3 = _blocks_to_nchw(y2, x2.shape[2] // 2, x2.shape[3] // 2)          # (B, 32, 37, 37)

    # NCHW flatten == torch's x.view(B, -1); fc1 weights are used in their native layout.
    x_flat = x3.reshape(B, -1).astype(jnp.bfloat16)                       # (B, 43808)
    return mlp_head(x_flat, params["fc1_w"], params["fc1_b"],
                    params["fc2_w"].T, params["fc2_b"])


def symbol_cnn_reference(x_nchw, params):
    def conv(x, w, b):
        y = lax.conv_general_dilated(x, w, (1, 1), ((1, 1), (1, 1)),
                                     dimension_numbers=("NCHW", "OIHW", "NCHW"))
        return y + b[None, :, None, None]

    def pool(x):
        return lax.reduce_window(x, -jnp.inf, lax.max, (1, 1, 2, 2), (1, 1, 2, 2), "VALID")

    x = jnp.maximum(pool(conv(x_nchw, params["conv1_w"], params["conv1_b"])), 0.0)
    x = jnp.maximum(pool(conv(x, params["conv2_w"], params["conv2_b"])), 0.0)
    x = x.reshape(x.shape[0], -1)
    x = jnp.maximum(x @ params["fc1_w"].T + params["fc1_b"], 0.0)
    return x @ params["fc2_w"].T + params["fc2_b"]


if __name__ == "__main__":
    key = jax.random.PRNGKey(0)
    ks = jax.random.split(key, 9)
    hidden = 32          # hidden_layers
    B = 2
    # Deterministic synthetic parameters (shapes from SymbolCNN.__init__).
    params = {
        "conv1_w": 0.10 * jax.random.normal(ks[0], (16, 3, 3, 3), jnp.float32),
        "conv1_b": 0.10 * jax.random.normal(ks[1], (16,), jnp.float32),
        "conv2_w": 0.05 * jax.random.normal(ks[2], (32, 16, 3, 3), jnp.float32),
        "conv2_b": 0.10 * jax.random.normal(ks[3], (32,), jnp.float32),
        "fc1_w":   0.01 * jax.random.normal(ks[4], (hidden, 32 * 37 * 37), jnp.float32),
        "fc1_b":   0.10 * jax.random.normal(ks[5], (hidden,), jnp.float32),
        "fc2_w":   0.10 * jax.random.normal(ks[6], (2, hidden), jnp.float32),
        "fc2_b":   0.10 * jax.random.normal(ks[7], (2,), jnp.float32),
    }
    # Input is NCHW; 150x150 is implied by fc1 expecting 32*37*37 features (150 -> 75 -> 37).
    x = jax.random.normal(ks[8], (B, 3, 150, 150), jnp.float32)

    out = jax.block_until_ready(symbol_cnn_forward(x, params))
    ref = jax.block_until_ready(symbol_cnn_reference(x, params))

    assert out.shape == (B, 2), out.shape
    max_err = float(jnp.max(jnp.abs(out - ref)))
    assert bool(jnp.allclose(out, ref, rtol=1e-2, atol=1e-2)), f"mismatch, max abs err={max_err}"
    print("KERNEL_OK")
</pallas_src>

<mosaic_0001>
module attributes {stable_mosaic.version = 11 : i64} {
  func.func @kernel(%arg0: i32, %arg1: i32, %arg2: memref<1x1x48x1875xbf16, #tpu.memory_space<vmem>>, %arg3: memref<64x48xbf16, #tpu.memory_space<vmem>>, %arg4: memref<16x1xf32, #tpu.memory_space<vmem>>, %arg5: memref<1x1x16x1875xf32, #tpu.memory_space<vmem>>) attributes {dimension_semantics = [#tpu.dimension_semantics<parallel>, #tpu.dimension_semantics<parallel>], iteration_bounds = array<i64: 2, 3>, scalar_prefetch = 0 : i64, scratch_operands = 0 : i64, tpu.core_type = #tpu.core_type<tc>, window_params = [{transform_indices = @transform_0, window_bounds = array<i64: 1, 1, 48, 1875>}, {pipeline_mode = #tpu.pipeline_mode<synchronous>, transform_indices = @transform_1, window_bounds = array<i64: 64, 48>}, {pipeline_mode = #tpu.pipeline_mode<synchronous>, transform_indices = @transform_2, window_bounds = array<i64: 16, 1>}, {transform_indices = @transform_3, window_bounds = array<i64: 1, 1, 16, 1875>}]} {
    %c0 = arith.constant 0 : index
    %c0_0 = arith.constant 0 : index
    %c0_1 = arith.constant 0 : index
    %c0_2 = arith.constant 0 : index
    %0 = vector.load %arg2[%c0, %c0_0, %c0_1, %c0_2] : memref<1x1x48x1875xbf16, #tpu.memory_space<vmem>>, vector<1x1x48x1875xbf16>
    %1 = vector.shape_cast %0 : vector<1x1x48x1875xbf16> to vector<48x1875xbf16>
    %c0_3 = arith.constant 0 : index
    %c0_4 = arith.constant 0 : index
    %2 = vector.load %arg3[%c0_3, %c0_4] : memref<64x48xbf16, #tpu.memory_space<vmem>>, vector<64x48xbf16>
    %cst = arith.constant dense<0.000000e+00> : vector<64x1875xf32>
    %3 = tpu.matmul %2, %1, %cst {dimension_numbers = #tpu.dot_dimension_numbers<[1], [0], [0], [1], [0, 0, 1, 1], [], []>} : vector<64x48xbf16>, vector<48x1875xbf16>, vector<64x1875xf32> -> vector<64x1875xf32>
    %4 = vector.extract_strided_slice %3 {offsets = [0, 0], sizes = [16, 1875], strides = [1, 1]} : vector<64x1875xf32> to vector<16x1875xf32>
    %5 = vector.extract_strided_slice %3 {offsets = [16, 0], sizes = [16, 1875], strides = [1, 1]} : vector<64x1875xf32> to vector<16x1875xf32>
    %6 = arith.maximumf %4, %5 : vector<16x1875xf32>
    %7 = vector.extract_strided_slice %3 {offsets = [32, 0], sizes = [16, 1875], strides = [1, 1]} : vector<64x1875xf32> to vector<16x1875xf32>
    %8 = vector.extract_strided_slice %3 {offsets = [48, 0], sizes = [16, 1875], strides = [1, 1]} : vector<64x1875xf32> to vector<16x1875xf32>
    %9 = arith.maximumf %7, %8 : vector<16x1875xf32>
    %10 = arith.maximumf %6, %9 : vector<16x1875xf32>
    %c0_5 = arith.constant 0 : index
    %c0_6 = arith.constant 0 : index
    %11 = vector.load %arg4[%c0_5, %c0_6] : memref<16x1xf32, #tpu.memory_space<vmem>>, vector<16x1xf32>
    %12 = vector.broadcast %11 : vector<16x1xf32> to vector<16x1875xf32>
    %13 = arith.addf %10, %12 : vector<16x1875xf32>
    %cst_7 = arith.constant 0.000000e+00 : f32
    %14 = vector.broadcast %cst_7 : f32 to vector<16x1875xf32>
    %15 = arith.maximumf %13, %14 : vector<16x1875xf32>
    %c0_8 = arith.constant 0 : index
    %c0_9 = arith.constant 0 : index
    %c0_10 = arith.constant 0 : index
    %c0_11 = arith.constant 0 : index
    %16 = vector.load %arg5[%c0_8, %c0_9, %c0_10, %c0_11] : memref<1x1x16x1875xf32, #tpu.memory_space<vmem>>, vector<1x1x16x1875xf32>
    %17 = vector.shape_cast %16 : vector<1x1x16x1875xf32> to vector<16x1875xf32>
    %18 = vector.shape_cast %15 : vector<16x1875xf32> to vector<1x1x16x1875xf32>
    tpu.vector_store %arg5[%c0_8, %c0_9, %c0_10, %c0_11], %18 {strides = array<i32>} : memref<1x1x16x1875xf32, #tpu.memory_space<vmem>>, vector<1x1x16x1875xf32>,
    return
  }
  func.func @transform_0(%arg0: i32, %arg1: i32) -> (i32, i32, i32, i32) {
    %c0_i32 = arith.constant 0 : i32
    %c0_i32_0 = arith.constant 0 : i32
    %c0_i32_1 = arith.constant 0 : i32
    return %arg0, %arg1, %c0_i32, %c0_i32_0 : i32, i32, i32, i32
  }
  func.func @transform_1(%arg0: i32, %arg1: i32) -> (i32, i32) {
    %c0_i32 = arith.constant 0 : i32
    %c0_i32_0 = arith.constant 0 : i32
    %c0_i32_1 = arith.constant 0 : i32
    return %c0_i32, %c0_i32_0 : i32, i32
  }
  func.func @transform_2(%arg0: i32, %arg1: i32) -> (i32, i32) {
    %c0_i32 = arith.constant 0 : i32
    %c0_i32_0 = arith.constant 0 : i32
    %c0_i32_1 = arith.constant 0 : i32
    return %c0_i32, %c0_i32_0 : i32, i32
  }
  func.func @transform_3(%arg0: i32, %arg1: i32) -> (i32, i32, i32, i32) {
    %c0_i32 = arith.constant 0 : i32
    %c0_i32_0 = arith.constant 0 : i32
    %c0_i32_1 = arith.constant 0 : i32
    return %arg0, %arg1, %c0_i32, %c0_i32_0 : i32, i32, i32, i32
  }
}

</mosaic_0001>

<llo_original>
// kernel: tpu_custom_call.1
$region0: #{tpu_custom_call.1}
  #allocation0 [shape = 'u32[]', space=smem, size = 0x4, offset = 0x4, fixed_abs, tag = 'smem constant byte address 0x4 - core index']
  #allocation1 [shape = 'u32[144,128]{1,0:T(1,128)}', space=vmem, size = 0x12000, scoped, tag = 'internal scratch']
  %s0 = inlined_call_operand.hbm [shape: bf16[2,3,48,1875], index: 0, kind: input, shape index: {}]
  %s1 = inlined_call_operand.vmem [shape: bf16[64,48], index: 1, kind: input, shape index: {}]
  %s2 = inlined_call_operand.vmem [shape: f32[16,1], index: 2, kind: input, shape index: {}]
  %s3 = inlined_call_operand.hbm [shape: f32[2,3,16,1875], index: 3, kind: output, shape index: {}]
  %s4 = sld [smem:[#allocation0]]
  $region49: #{tpu_custom_call.1} parent=0
    _
  %s6 = ssub.s32 1, %s4
  %s7 = scalar_select 0, %s6, %s4
  $region1: #{tpu_custom_call.1} parent=0
    #allocation2 [shape = 'u8[368640]{0}', space=vmem, size = 0x5a000, scoped, tag = 'input window, operand 0']
    #allocation3 [shape = 's32[2]{0}', space=sflag, size = 0x8, scoped, tag = 'scoped memory for tpu_custom_call.1']
    #allocation4 [shape = 's32[2]{0}', space=sflag, size = 0x8, scoped, tag = 'scoped memory for tpu_custom_call.1']
    #allocation5 [shape = 'u8[245760]{0}', space=vmem, size = 0x3c000, scoped, tag = 'output window, operand 0']
    %8 = vsyncpa [#allocation3], 0
    %s9 = scalar_lea.sflag [#allocation3], 1
    %10 = vsyncpa %s9, 0
    %11 = vsyncpa [#allocation4], 0
    %s12 = scalar_lea.sflag [#allocation4], 1
    %13 = vsyncpa %s12, 0
    loop: start=0, step=1, limit=8
    $region2: #{tpu_custom_call.1} parent=1 // loop_pre_header
      _
    $region3: #{tpu_custom_call.1} parent=1 // loop_header
      %s15 = sphi 0, %s19
      %p16 = scmp.ge.s32.totalorder %s15, 8
      %s22 = sphi 0, %s34
      %s23 = sphi 0, %s30
      %s24 = sphi 0, %s22
      %s25 = sphi 0, %s23
      %s26 = sphi 0, %s24
      %s27 = sphi 0, %s25
      %s39 = sphi 0, %s41
      %s42 = sphi 0, %s39
      %s43 = sphi 0, %s42
      %s59 = sphi 0, %s43
      %s63 = sphi 0, %s63
      %s65 = sphi 0, %s63
      %s66 = sphi 0, %s65
      %s80 = sphi 0, %s66
      %s84 = sphi 0, %s84
      %s86 = sphi 0, %s84
      %s87 = sphi 0, %s86
      %s101 = sphi 0, %s87
      %s109 = sphi 0, %s111
      %s112 = sphi 0, %s109
      %s113 = sphi 0, %s112
      %s129 = sphi 0, %s113
    $region4: #{tpu_custom_call.1} parent=1 // loop_header_branch
      %18 = sbr.rel (%p16) target = $region8
    $region5: #{tpu_custom_call.1} parent=1 // loop_body
      %s20 = ssub.s32 %s15, 1
      %s21 = ssub.s32 %s15, 2
      %s28 = sadd.s32 1, %s23
      %p29 = scmp.ge.s32.totalorder %s28, 3
      %s30 = scalar_select %p29, 0, %s28
      %s31 = sadd.s32 1, %s22
      %s32 = scalar_select %p29, %s31, %s22
      %p33 = scmp.ge.s32.totalorder %s32, 2
      %s34 = scalar_select %p33, 0, %s32
      %s35 = ssub.s32 %s22, %s34
      %s36 = ssub.s32 %s23, %s30
      %s37 = sor.u32 %s35, %s36
      %p38 = scmp.eq.s32.totalorder %s37, 0
      %s40 = sadd.s32 %s39, 1
      %s41 = scalar_select %p38, %s39, %s40
      %p44 = pneg %p38
      %p45 = scmp.eq.s32.totalorder %s15, 5
      %p46 = por %p44, %p45
      %p47 = scmp.ne.s32.totalorder %s39, %s42
      %p48 = scmp.eq.s32.totalorder %s15, 0
      %p49 = por %p47, %p48
      %p50 = scmp.ne.s32.totalorder %s39, %s42
      %p51 = scmp.eq.s32.totalorder %s20, 5
      %p52 = por %p50, %p51
      %p53 = scmp.ne.s32.totalorder %s42, %s43
      %p54 = scmp.eq.s32.totalorder %s20, 0
      %p55 = por %p53, %p54
      %p56 = scmp.ne.s32.totalorder %s42, %s43
      %p57 = scmp.eq.s32.totalorder %s21, 5
      %p58 = por %p56, %p57
      %p60 = scmp.ne.s32.totalorder %s43, %s59
      %p61 = scmp.eq.s32.totalorder %s21, 0
      %p62 = por %p60, %p61
      %s64 = sadd.s32 %s63, 1
      %p67 = scmp.eq.s32.totalorder %s15, 5
      %p68 = scmp.ne.s32.totalorder %s63, %s65
      %p69 = scmp.eq.s32.totalorder %s15, 0
      %p70 = por %p68, %p69
      %p71 = scmp.ne.s32.totalorder %s63, %s65
      %p72 = scmp.eq.s32.totalorder %s20, 5
      %p73 = por %p71, %p72
      %p74 = scmp.ne.s32.totalorder %s65, %s66
      %p75 = scmp.eq.s32.totalorder %s20, 0
      %p76 = por %p74, %p75
      %p77 = scmp.ne.s32.totalorder %s65, %s66
      %p78 = scmp.eq.s32.totalorder %s21, 5
      %p79 = por %p77, %p78
      %p81 = scmp.ne.s32.totalorder %s66, %s80
      %p82 = scmp.eq.s32.totalorder %s21, 0
      %p83 = por %p81, %p82
      %s85 = sadd.s32 %s84, 1
      %p88 = scmp.eq.s32.totalorder %s15, 5
      %p89 = scmp.ne.s32.totalorder %s84, %s86
      %p90 = scmp.eq.s32.totalorder %s15, 0
      %p91 = por %p89, %p90
      %p92 = scmp.ne.s32.totalorder %s84, %s86
      %p93 = scmp.eq.s32.totalorder %s20, 5
      %p94 = por %p92, %p93
      %p95 = scmp.ne.s32.totalorder %s86, %s87
      %p96 = scmp.eq.s32.totalorder %s20, 0
      %p97 = por %p95, %p96
      %p98 = scmp.ne.s32.totalorder %s86, %s87
      %p99 = scmp.eq.s32.totalorder %s21, 5
      %p100 = por %p98, %p99
      %p102 = scmp.ne.s32.totalorder %s87, %s101
      %p103 = scmp.eq.s32.totalorder %s21, 0
      %p104 = por %p102, %p103
      %s105 = ssub.s32 %s22, %s34
      %s106 = ssub.s32 %s23, %s30
      %s107 = sor.u32 %s105, %s106
      %p108 = scmp.eq.s32.totalorder %s107, 0
      %s110 = sadd.s32 %s109, 1
      %s111 = scalar_select %p108, %s109, %s110
      %p114 = pneg %p108
      %p115 = scmp.eq.s32.totalorder %s15, 5
      %p116 = por %p114, %p115
      %p117 = scmp.ne.s32.totalorder %s109, %s112
      %p118 = scmp.eq.s32.totalorder %s15, 0
      %p119 = por %p117, %p118
      %p120 = scmp.ne.s32.totalorder %s109, %s112
      %p121 = scmp.eq.s32.totalorder %s20, 5
      %p122 = por %p120, %p121
      %p123 = scmp.ne.s32.totalorder %s112, %s113
      %p124 = scmp.eq.s32.totalorder %s20, 0
      %p125 = por %p123, %p124
      %p126 = scmp.ne.s32.totalorder %s112, %s113
      %p127 = scmp.eq.s32.totalorder %s21, 5
      %p128 = por %p126, %p127
      %p130 = scmp.ne.s32.totalorder %s113, %s129
      %p131 = scmp.eq.s32.totalorder %s21, 0
      %p132 = por %p130, %p131
      %p133 = scmp.le.s32.totalorder 1, %s15
      %p134 = scmp.lt.s32.totalorder %s15, 7
      %p135 = pnand %p133, %p134
      %p136 = pneg %p135
      // Predicated region
      $region9: #{tpu_custom_call.1} parent=5 // pred_check
        _
      $region10: #{tpu_custom_call.1} parent=5 // pred_check_branch
        %138 = sbr.rel (%p135) target = $region12
      $region11: #{tpu_custom_call.1} parent=5 // pred_region
        %s139 = ssub.s32 %s15, 1
        // Predicated region
        $region13: #{tpu_custom_call.1} parent=11 // pred_check
          %p140 = pneg %p76
        $region14: #{tpu_custom_call.1} parent=11 // pred_check_branch
          %142 = sbr.rel (%p140) target = $region16
        $region15: #{tpu_custom_call.1} parent=11 // pred_region
          _
        $region16: #{tpu_custom_call.1} parent=11 // pred_fallthru
          _
        // Predicated region
        $region17: #{tpu_custom_call.1} parent=11 // pred_check
          %p143 = pneg %p97
        $region18: #{tpu_custom_call.1} parent=11 // pred_check_branch
          %145 = sbr.rel (%p143) target = $region20
        $region19: #{tpu_custom_call.1} parent=11 // pred_region
          _
        $region20: #{tpu_custom_call.1} parent=11 // pred_fallthru
          _
      $region12: #{tpu_custom_call.1} parent=5 // pred_fallthru
        _
      %p146 = scmp.lt.s32.totalorder %s15, 6
      // Predicated region
      $region21: #{tpu_custom_call.1} parent=5 // pred_check
        %p147 = pneg %p146
      $region22: #{tpu_custom_call.1} parent=5 // pred_check_branch
        %149 = sbr.rel (%p147) target = $region24
      $region23: #{tpu_custom_call.1} parent=5 // pred_region
        // Predicated region
        $region25: #{tpu_custom_call.1} parent=23 // pred_check
          %p150 = pneg %p49
        $region26: #{tpu_custom_call.1} parent=23 // pred_check_branch
          %152 = sbr.rel (%p150) target = $region28
        $region27: #{tpu_custom_call.1} parent=23 // pred_region
          %s153 = sand.u32 %s39, 1
          %s154 = scalar_lea.sflag [#allocation3], %s153
          %s155 = sand.u32 %s39, 1
          %s156 = smul.addr %s155, 360
          %s157 = scalar_lea.vmem [#allocation2], %s156
          %s159 = ssub.s32 5760, 5760
          %160 = vsyncadd %s154, %s159
          %s161 = smul.addr %s23, 90
          %s162 = smul.addr %s22, 270
          %s163 = sadd.s32 %s161, %s162
          %s164 = smul.addr %s163, 64
          %s165 = scalar_lea.hbm %s0, %s164
          %s166 = sshll.u32 %s157, 4
          %s167 = int_to_ptr.vmem [resolvable:$true] %s166
          %172 = dma.hbm_to_vmem [thread:$0]  %s165, 5760, %s167, %s154, 960, 960, 60
        $region28: #{tpu_custom_call.1} parent=23 // pred_fallthru
          _
      $region24: #{tpu_custom_call.1} parent=5 // pred_fallthru
        _
      %p173 = scmp.le.s32.totalorder 1, %s15
      %p174 = scmp.lt.s32.totalorder %s15, 7
      %p175 = pnand %p173, %p174
      %p176 = pneg %p175
      // Predicated region
      $region29: #{tpu_custom_call.1} parent=5 // pred_check
        _
      $region30: #{tpu_custom_call.1} parent=5 // pred_check_branch
        %178 = sbr.rel (%p175) target = $region32
      $region31: #{tpu_custom_call.1} parent=5 // pred_region
        %s179 = ssub.s32 %s15, 1
        %s180 = sand.u32 %s42, 1
        %s181 = scalar_lea.sflag [#allocation3], %s180
        %s182 = sand.u32 %s42, 1
        %s183 = smul.addr %s182, 360
        %s184 = scalar_lea.vmem [#allocation2], %s183
        // Predicated region
        $region33: #{tpu_custom_call.1} parent=31 // pred_check
          %p185 = pneg %p55
        $region34: #{tpu_custom_call.1} parent=31 // pred_check_branch
          %187 = sbr.rel (%p185) target = $region36
        $region35: #{tpu_custom_call.1} parent=31 // pred_region
          %188 = dma.done %s181, 5760
        $region36: #{tpu_custom_call.1} parent=31 // pred_fallthru
          _
        %s189 = sand.u32 %s42, 1
        %s190 = scalar_lea.sflag [#allocation3], %s189
        %s191 = sand.u32 %s42, 1
        %s192 = smul.addr %s191, 360
        %s193 = scalar_lea.vmem [#allocation2], %s192
        %p194 = pneg %p55
        %p195 = pneg %p52
        %p196 = pneg %p76
        %p197 = pneg %p73
        %p198 = pneg %p97
        %p199 = pneg %p94
        %p200 = pneg %p125
        %p201 = pneg %p122
        %s202 = sand.u32 %s112, 1
        %s203 = scalar_lea.sflag [#allocation4], %s202
        %s204 = sand.u32 %s112, 1
        %s205 = smul.addr %s204, 240
        %s206 = scalar_lea.vmem [#allocation5], %s205
        %v208 = vld [vmem:[%s184] sm:$0xff]
        %v209 = vld [vmem:[%s184 + $0x8] sm:$0xff]
        %v210 = vld [vmem:[%s184 + $0x10] sm:$0xff]
        %v211 = vld [vmem:[%s184 + $0x18] sm:$0xff]
        %v212 = vld [vmem:[%s184 + $0x20] sm:$0xff]
        %v213 = vld [vmem:[%s184 + $0x28] sm:$0xff]
        %v214 = vld [vmem:[%s184 + $0x30] sm:$0xff]
        %v215 = vld [vmem:[%s184 + $0x38] sm:$0xf]
        %v216 = vld [vmem:[%s184 + $0x3c] sm:$0xff]
        %v217 = vld [vmem:[%s184 + $0x44] sm:$0xff]
        %v218 = vld [vmem:[%s184 + $0x4c] sm:$0xff]
        %v219 = vld [vmem:[%s184 + $0x54] sm:$0xff]
        %v220 = vld [vmem:[%s184 + $0x5c] sm:$0xff]
        %v221 = vld [vmem:[%s184 + $0x64] sm:$0xff]
        %v222 = vld [vmem:[%s184 + $0x6c] sm:$0xff]
        %v223 = vld [vmem:[%s184 + $0x74] sm:$0xf]
        %v224 = vld [vmem:[%s184 + $0x78] sm:$0xff]
        %v225 = vld [vmem:[%s184 + $0x80] sm:$0xff]
        %v226 = vld [vmem:[%s184 + $0x88] sm:$0xff]
        %v227 = vld [vmem:[%s184 + $0x90] sm:$0xff]
        %v228 = vld [vmem:[%s184 + $0x98] sm:$0xff]
        %v229 = vld [vmem:[%s184 + $0xa0] sm:$0xff]
        %v230 = vld [vmem:[%s184 + $0xa8] sm:$0xff]
        %v231 = vld [vmem:[%s184 + $0xb0] sm:$0xf]
        %v232 = vld [vmem:[%s184 + $0xb4] sm:$0xff]
        %v233 = vld [vmem:[%s184 + $0xbc] sm:$0xff]
        %v234 = vld [vmem:[%s184 + $0xc4] sm:$0xff]
        %v235 = vld [vmem:[%s184 + $0xcc] sm:$0xff]
        %v236 = vld [vmem:[%s184 + $0xd4] sm:$0xff]
        %v237 = vld [vmem:[%s184 + $0xdc] sm:$0xff]
        %v238 = vld [vmem:[%s184 + $0xe4] sm:$0xff]
        %v239 = vld [vmem:[%s184 + $0xec] sm:$0xf]
        %v240 = vld [vmem:[%s184 + $0xf0] sm:$0xff]
        %v241 = vld [vmem:[%s184 + $0xf8] sm:$0xff]
        %v242 = vld [vmem:[%s184 + $0x100] sm:$0xff]
        %v243 = vld [vmem:[%s184 + $0x108] sm:$0xff]
        %v244 = vld [vmem:[%s184 + $0x110] sm:$0xff]
        %v245 = vld [vmem:[%s184 + $0x118] sm:$0xff]
        %v246 = vld [vmem:[%s184 + $0x120] sm:$0xff]
        %v247 = vld [vmem:[%s184 + $0x128] sm:$0xf]
        %v248 = vld [vmem:[%s184 + $0x12c] sm:$0xff]
        %v249 = vld [vmem:[%s184 + $0x134] sm:$0xff]
        %v250 = vld [vmem:[%s184 + $0x13c] sm:$0xff]
        %v251 = vld [vmem:[%s184 + $0x144] sm:$0xff]
        %v252 = vld [vmem:[%s184 + $0x14c] sm:$0xff]
        %v253 = vld [vmem:[%s184 + $0x154] sm:$0xff]
        %v254 = vld [vmem:[%s184 + $0x15c] sm:$0xff]
        %v255 = vld [vmem:[%s184 + $0x164] sm:$0xf]
        %v256 = vld [vmem:[%s1] sm:$0xf]
        %v257 = vld [vmem:[%s1 + $0x4] sm:$0xf]
        %v258 = vld [vmem:[%s1 + $0x8] sm:$0xf]
        %v259 = vld [vmem:[%s1 + $0xc] sm:$0xf]
        %v260 = vld [vmem:[%s1 + $0x10] sm:$0xf]
        %v261 = vld [vmem:[%s1 + $0x14] sm:$0xf]
        %v262 = vld [vmem:[%s1 + $0x18] sm:$0xf]
        %v263 = vld [vmem:[%s1 + $0x1c] sm:$0xf]
        %v272 = vunpack.c.l.b16 %v256
        %v273 = vunpack.c.l.b16 %v257
        %v274 = vunpack.c.l.b16 %v258
        %v275 = vunpack.c.l.b16 %v259
        %v276 = vunpack.c.l.b16 %v260
        %v277 = vunpack.c.l.b16 %v261
        %v278 = vunpack.c.l.b16 %v262
        %v279 = vunpack.c.l.b16 %v263
        %v280 = vpack.c.b16 %v273, %v272
        %v281 = vpack.c.b16 %v275, %v274
        %v282 = vpack.c.b16 %v277, %v276
        %v283 = vpack.c.b16 %v279, %v278
        %v332 = vunpack.c.l.b16 %v208
        %v333 = vunpack.c.h.b16 %v208
        %v334 = vunpack.c.l.b16 %v209
        %v335 = vunpack.c.h.b16 %v209
        %v336 = vunpack.c.l.b16 %v210
        %v337 = vunpack.c.h.b16 %v210
        %v338 = vunpack.c.l.b16 %v211
        %v339 = vunpack.c.h.b16 %v211
        %v340 = vunpack.c.l.b16 %v212
        %v341 = vunpack.c.h.b16 %v212
        %v342 = vunpack.c.l.b16 %v213
        %v343 = vunpack.c.h.b16 %v213
        %v344 = vunpack.c.l.b16 %v214
        %v345 = vunpack.c.h.b16 %v214
        %v346 = vunpack.c.l.b16 %v215
        %v347 = vunpack.c.l.b16 %v216
        %v348 = vunpack.c.h.b16 %v216
        %v349 = vunpack.c.l.b16 %v217
        %v350 = vunpack.c.h.b16 %v217
        %v351 = vunpack.c.l.b16 %v218
        %v352 = vunpack.c.h.b16 %v218
        %v353 = vunpack.c.l.b16 %v219
        %v354 = vunpack.c.h.b16 %v219
        %v355 = vunpack.c.l.b16 %v220
        %v356 = vunpack.c.h.b16 %v220
        %v357 = vunpack.c.l.b16 %v221
        %v358 = vunpack.c.h.b16 %v221
        %v359 = vunpack.c.l.b16 %v222
        %v360 = vunpack.c.h.b16 %v222
        %v361 = vunpack.c.l.b16 %v223
        %v362 = vunpack.c.l.b16 %v224
        %v363 = vunpack.c.h.b16 %v224
        %v364 = vunpack.c.l.b16 %v225
        %v365 = vunpack.c.h.b16 %v225
        %v366 = vunpack.c.l.b16 %v226
        %v367 = vunpack.c.h.b16 %v226
        %v368 = vunpack.c.l.b16 %v227
        %v369 = vunpack.c.h.b16 %v227
        %v370 = vunpack.c.l.b16 %v228
        %v371 = vunpack.c.h.b16 %v228
        %v372 = vunpack.c.l.b16 %v229
        %v373 = vunpack.c.h.b16 %v229
        %v374 = vunpack.c.l.b16 %v230
        %v375 = vunpack.c.h.b16 %v230
        %v376 = vunpack.c.l.b16 %v231
        %v377 = vunpack.c.l.b16 %v232
        %v378 = vunpack.c.h.b16 %v232
        %v379 = vunpack.c.l.b16 %v233
        %v380 = vunpack.c.h.b16 %v233
        %v381 = vunpack.c.l.b16 %v234
        %v382 = vunpack.c.h.b16 %v234
        %v383 = vunpack.c.l.b16 %v235
        %v384 = vunpack.c.h.b16 %v235
        %v385 = vunpack.c.l.b16 %v236
        %v386 = vunpack.c.h.b16 %v236
        %v387 = vunpack.c.l.b16 %v237
        %v388 = vunpack.c.h.b16 %v237
        %v389 = vunpack.c.l.b16 %v238
        %v390 = vunpack.c.h.b16 %v238
        %v391 = vunpack.c.l.b16 %v239
        %v392 = vunpack.c.l.b16 %v240
        %v393 = vunpack.c.h.b16 %v240
        %v394 = vunpack.c.l.b16 %v241
        %v395 = vunpack.c.h.b16 %v241
        %v396 = vunpack.c.l.b16 %v242
        %v397 = vunpack.c.h.b16 %v242
        %v398 = vunpack.c.l.b16 %v243
        %v399 = vunpack.c.h.b16 %v243
        %v400 = vunpack.c.l.b16 %v244
        %v401 = vunpack.c.h.b16 %v244
        %v402 = vunpack.c.l.b16 %v245
        %v403 = vunpack.c.h.b16 %v245
        %v404 = vunpack.c.l.b16 %v246
        %v405 = vunpack.c.h.b16 %v246
        %v406 = vunpack.c.l.b16 %v247
        %v407 = vunpack.c.l.b16 %v248
        %v408 = vunpack.c.h.b16 %v248
        %v409 = vunpack.c.l.b16 %v249
        %v410 = vunpack.c.h.b16 %v249
        %v411 = vunpack.c.l.b16 %v250
        %v412 = vunpack.c.h.b16 %v250
        %v413 = vunpack.c.l.b16 %v251
        %v414 = vunpack.c.h.b16 %v251
        %v415 = vunpack.c.l.b16 %v252
        %v416 = vunpack.c.h.b16 %v252
        %v417 = vunpack.c.l.b16 %v253
        %v418 = vunpack.c.h.b16 %v253
        %v419 = vunpack.c.l.b16 %v254
        %v420 = vunpack.c.h.b16 %v254
        %v421 = vunpack.c.l.b16 %v255
        %v422 = vpack.c.b16 %v347, %v332
        %v423 = vpack.c.b16 %v348, %v333
        %v424 = vpack.c.b16 %v349, %v334
        %v425 = vpack.c.b16 %v350, %v335
        %v426 = vpack.c.b16 %v351, %v336
        %v427 = vpack.c.b16 %v352, %v337
        %v428 = vpack.c.b16 %v353, %v338
        %v429 = vpack.c.b16 %v354, %v339
        %v430 = vpack.c.b16 %v355, %v340
        %v431 = vpack.c.b16 %v356, %v341
        %v432 = vpack.c.b16 %v357, %v342
        %v433 = vpack.c.b16 %v358, %v343
        %v434 = vpack.c.b16 %v359, %v344
        %v435 = vpack.c.b16 %v360, %v345
        %v436 = vpack.c.b16 %v361, %v346
        %v437 = vpack.c.b16 %v377, %v362
        %v438 = vpack.c.b16 %v378, %v363
        %v439 = vpack.c.b16 %v379, %v364
        %v440 = vpack.c.b16 %v380, %v365
        %v441 = vpack.c.b16 %v381, %v366
        %v442 = vpack.c.b16 %v382, %v367
        %v443 = vpack.c.b16 %v383, %v368
        %v444 = vpack.c.b16 %v384, %v369
        %v445 = vpack.c.b16 %v385, %v370
        %v446 = vpack.c.b16 %v386, %v371
        %v447 = vpack.c.b16 %v387, %v372
        %v448 = vpack.c.b16 %v388, %v373
        %v449 = vpack.c.b16 %v389, %v374
        %v450 = vpack.c.b16 %v390, %v375
        %v451 = vpack.c.b16 %v391, %v376
        %v452 = vpack.c.b16 %v407, %v392
        %v453 = vpack.c.b16 %v408, %v393
        %v454 = vpack.c.b16 %v409, %v394
        %v455 = vpack.c.b16 %v410, %v395
        %v456 = vpack.c.b16 %v411, %v396
        %v457 = vpack.c.b16 %v412, %v397
        %v458 = vpack.c.b16 %v413, %v398
        %v459 = vpack.c.b16 %v414, %v399
        %v460 = vpack.c.b16 %v415, %v400
        %v461 = vpack.c.b16 %v416, %v401
        %v462 = vpack.c.b16 %v417, %v402
        %v463 = vpack.c.b16 %v418, %v403
        %v464 = vpack.c.b16 %v419, %v404
        %v465 = vpack.c.b16 %v420, %v405
        %v466 = vpack.c.b16 %v421, %v406
        %vm512 = vcmask 392192
        %v514 = vsel %vm512, %v280, 0
        %v517 = vsel %vm512, %v281, 0
        %v520 = vsel %vm512, %v282, 0
        %v523 = vsel %vm512, %v283, 0
        %525 = vmatprep.subr.bf16.mxu0 %v423
        %526 = vmatpush1.bf16.msra.mxu0 %v422
        %527 = vmatprep.subr.bf16.mxu0 %v438
        %528 = vmatpush1.bf16.msra.mxu0 %v437
        %529 = vmatprep.subr.bf16.mxu0 %v453
        %530 = vmatpush1.bf16.msra.mxu0 %v452
        %531 = vmatprep.subr.bf16.mxu0 0
        %532 = vmatpush1.bf16.msra.mxu0 0
        %533 = vmatprep.subr.bf16.mxu0 0
        %534 = vmatpush1.bf16.msra.mxu0 0
        %535 = vmatprep.subr.bf16.mxu0 0
        %536 = vmatpush1.bf16.msra.mxu0 0
        %537 = vmatprep.subr.bf16.mxu0 0
        %538 = vmatpush1.bf16.msra.mxu0 0
        %539 = vmatprep.subr.bf16.mxu0 0
        %540 = vmatpush1.bf16.msra.mxu0 0
        %541 = vmatprep.subr.bf16.mxu0 0
        %542 = vmatpush1.bf16.msra.mxu0 0
        %543 = vmatprep.subr.bf16.mxu0 0
        %544 = vmatpush1.bf16.msra.mxu0 0
        %545 = vmatprep.subr.bf16.mxu0 0
        %546 = vmatpush1.bf16.msra.mxu0 0
        %547 = vmatprep.subr.bf16.mxu0 0
        %548 = vmatpush1.bf16.msra.mxu0 0
        %549 = vmatprep.subr.bf16.mxu0 0
        %550 = vmatpush1.bf16.msra.mxu0 0
        %551 = vmatprep.subr.bf16.mxu0 0
        %552 = vmatpush1.bf16.msra.mxu0 0
        %553 = vmatprep.subr.bf16.mxu0 0
        %554 = vmatpush1.bf16.msra.mxu0 0
        %555 = vmatprep.subr.bf16.mxu0 0
        %556 = vmatpush1.bf16.msra.mxu0 0
        %557 = vmatprep.mubr.bf16.mxu0 0
        %558 = vmatmul.mubr.bf16.gmra.mrb[0].mxu0 %v514
        %v559 = vpop.f32.mrb[0].mxu0
        %v560 = vadd.f32 0.0, %v559
        %v561 = vpop.f32.mrb[0].mxu0
        %v562 = vadd.f32 0.0, %v561
        %v563 = vpop.f32.mrb[0].mxu0
        %v564 = vadd.f32 0.0, %v563
        %v565 = vpop.f32.mrb[0].mxu0
        %v566 = vadd.f32 0.0, %v565
        %567 = vmatprep.mubr.bf16.mxu0 0
        %568 = vmatmul.mubr.bf16.gmra.mrb[0].mxu0 %v517
        %v569 = vpop.f32.mrb[0].mxu0
        %v570 = vadd.f32 0.0, %v569
        %v571 = vpop.f32.mrb[0].mxu0
        %v572 = vadd.f32 0.0, %v571
        %v573 = vpop.f32.mrb[0].mxu0
        %v574 = vadd.f32 0.0, %v573
        %v575 = vpop.f32.mrb[0].mxu0
        %v576 = vadd.f32 0.0, %v575
        %577 = vmatprep.mubr.bf16.mxu0 0
        %578 = vmatmul.mubr.bf16.gmra.mrb[0].mxu0 %v520
        %v579 = vpop.f32.mrb[0].mxu0
        %v580 = vadd.f32 0.0, %v579
        %v581 = vpop.f32.mrb[0].mxu0
        %v582 = vadd.f32 0.0, %v581
        %v583 = vpop.f32.mrb[0].mxu0
        %v584 = vadd.f32 0.0, %v583
        %v585 = vpop.f32.mrb[0].mxu0
        %v586 = vadd.f32 0.0, %v585
        %587 = vmatprep.mubr.bf16.mxu0 0
        %588 = vmatmul.mubr.bf16.gmra.mrb[0].mxu0 %v523
        %v589 = vpop.f32.mrb[0].mxu0
        %v590 = vadd.f32 0.0, %v589
        %v591 = vpop.f32.mrb[0].mxu0
        %v592 = vadd.f32 0.0, %v591
        %v593 = vpop.f32.mrb[0].mxu0
        %v594 = vadd.f32 0.0, %v593
        %v595 = vpop.f32.mrb[0].mxu0
        %v596 = vadd.f32 0.0, %v595
        %597 = vdwg.mxu0
        %598 = vmatprep.subr.bf16.mxu0 %v425
        %599 = vmatpush1.bf16.msra.mxu0 %v424
        %600 = vmatprep.subr.bf16.mxu0 %v440
        %601 = vmatpush1.bf16.msra.mxu0 %v439
        %602 = vmatprep.subr.bf16.mxu0 %v455
        %603 = vmatpush1.bf16.msra.mxu0 %v454
        %604 = vmatprep.subr.bf16.mxu0 0
        %605 = vmatpush1.bf16.msra.mxu0 0
        %606 = vmatprep.subr.bf16.mxu0 0
        %607 = vmatpush1.bf16.msra.mxu0 0
        %608 = vmatprep.subr.bf16.mxu0 0
        %609 = vmatpush1.bf16.msra.mxu0 0
        %610 = vmatprep.subr.bf16.mxu0 0
        %611 = vmatpush1.bf16.msra.mxu0 0
        %612 = vmatprep.subr.bf16.mxu0 0
        %613 = vmatpush1.bf16.msra.mxu0 0
        %614 = vmatprep.subr.bf16.mxu0 0
        %615 = vmatpush1.bf16.msra.mxu0 0
        %616 = vmatprep.subr.bf16.mxu0 0
        %617 = vmatpush1.bf16.msra.mxu0 0
        %618 = vmatprep.subr.bf16.mxu0 0
        %619 = vmatpush1.bf16.msra.mxu0 0
        %620 = vmatprep.subr.bf16.mxu0 0
        %621 = vmatpush1.bf16.msra.mxu0 0
        %622 = vmatprep.subr.bf16.mxu0 0
        %623 = vmatpush1.bf16.msra.mxu0 0
        %624 = vmatprep.subr.bf16.mxu0 0
        %625 = vmatpush1.bf16.msra.mxu0 0
        %626 = vmatprep.subr.bf16.mxu0 0
        %627 = vmatpush1.bf16.msra.mxu0 0
        %628 = vmatprep.subr.bf16.mxu0 0
        %629 = vmatpush1.bf16.msra.mxu0 0
        %630 = vmatprep.mubr.bf16.mxu0 0
        %631 = vmatmul.mubr.bf16.gmra.mrb[0].mxu0 %v514
        %v632 = vpop.f32.mrb[0].mxu0
        %v633 = vadd.f32 0.0, %v632
        %v634 = vpop.f32.mrb[0].mxu0
        %v635 = vadd.f32 0.0, %v634
        %v636 = vpop.f32.mrb[0].mxu0
        %v637 = vadd.f32 0.0, %v636
        %v638 = vpop.f32.mrb[0].mxu0
        %v639 = vadd.f32 0.0, %v638
        %640 = vmatprep.mubr.bf16.mxu0 0
        %641 = vmatmul.mubr.bf16.gmra.mrb[0].mxu0 %v517
        %v642 = vpop.f32.mrb[0].mxu0
        %v643 = vadd.f32 0.0, %v642
        %v644 = vpop.f32.mrb[0].mxu0
        %v645 = vadd.f32 0.0, %v644
        %v646 = vpop.f32.mrb[0].mxu0
        %v647 = vadd.f32 0.0, %v646
        %v648 = vpop.f32.mrb[0].mxu0
        %v649 = vadd.f32 0.0, %v648
        %650 = vmatprep.mubr.bf16.mxu0 0
        %651 = vmatmul.mubr.bf16.gmra.mrb[0].mxu0 %v520
        %v652 = vpop.f32.mrb[0].mxu0
        %v653 = vadd.f32 0.0, %v652
        %v654 = vpop.f32.mrb[0].mxu0
        %v655 = vadd.f32 0.0, %v654
        %v656 = vpop.f32.mrb[0].mxu0
        %v657 = vadd.f32 0.0, %v656
        %v658 = vpop.f32.mrb[0].mxu0
        %v659 = vadd.f32 0.0, %v658
        %660 = vmatprep.mubr.bf16.mxu0 0
        %661 = vmatmul.mubr.bf16.gmra.mrb[0].mxu0 %v523
        %v662 = vpop.f32.mrb[0].mxu0
        %v663 = vadd.f32 0.0, %v662
        %v664 = vpop.f32.mrb[0].mxu0
        %v665 = vadd.f32 0.0, %v664
        %v666 = vpop.f32.mrb[0].mxu0
        %v667 = vadd.f32 0.0, %v666
        %v668 = vpop.f32.mrb[0].mxu0
        %v669 = vadd.f32 0.0, %v668
        %670 = vdwg.mxu0
        %671 = vmatprep.subr.bf16.mxu0 %v427
        %672 = vmatpush1.bf16.msra.mxu0 %v426
        %673 = vmatprep.subr.bf16.mxu0 %v442
        %674 = vmatpush1.bf16.msra.mxu0 %v441
        %675 = vmatprep.subr.bf16.mxu0 %v457
        %676 = vmatpush1.bf16.msra.mxu0 %v456
        %677 = vmatprep.subr.bf16.mxu0 0
        %678 = vmatpush1.bf16.msra.mxu0 0
        %679 = vmatprep.subr.bf16.mxu0 0
        %680 = vmatpush1.bf16.msra.mxu0 0
        %681 = vmatprep.subr.bf16.mxu0 0
        %682 = vmatpush1.bf16.msra.mxu0 0
        %683 = vmatprep.subr.bf16.mxu0 0
        %684 = vmatpush1.bf16.msra.mxu0 0
        %685 = vmatprep.subr.bf16.mxu0 0
        %686 = vmatpush1.bf16.msra.mxu0 0
        %687 = vmatprep.subr.bf16.mxu0 0
        %688 = vmatpush1.bf16.msra.mxu0 0
        %689 = vmatprep.subr.bf16.mxu0 0
        %690 = vmatpush1.bf16.msra.mxu0 0
        %691 = vmatprep.subr.bf16.mxu0 0
        %692 = vmatpush1.bf16.msra.mxu0 0
        %693 = vmatprep.subr.bf16.mxu0 0
        %694 = vmatpush1.bf16.msra.mxu0 0
        %695 = vmatprep.subr.bf16.mxu0 0
        %696 = vmatpush1.bf16.msra.mxu0 0
        %697 = vmatprep.subr.bf16.mxu0 0
        %698 = vmatpush1.bf16.msra.mxu0 0
        %699 = vmatprep.subr.bf16.mxu0 0
        %700 = vmatpush1.bf16.msra.mxu0 0
        %701 = vmatprep.subr.bf16.mxu0 0
        %702 = vmatpush1.bf16.msra.mxu0 0
        %703 = vmatprep.mubr.bf16.mxu0 0
        %704 = vmatmul.mubr.bf16.gmra.mrb[0].mxu0 %v514
        %v705 = vpop.f32.mrb[0].mxu0
        %v706 = vadd.f32 0.0, %v705
        %v707 = vpop.f32.mrb[0].mxu0
        %v708 = vadd.f32 0.0, %v707
        %v709 = vpop.f32.mrb[0].mxu0
        %v710 = vadd.f32 0.0, %v709
        %v711 = vpop.f32.mrb[0].mxu0
        %v712 = vadd.f32 0.0, %v711
        %713 = vmatprep.mubr.bf16.mxu0 0
        %714 = vmatmul.mubr.bf16.gmra.mrb[0].mxu0 %v517
        %v715 = vpop.f32.mrb[0].mxu0
        %v716 = vadd.f32 0.0, %v715
        %v717 = vpop.f32.mrb[0].mxu0
        %v718 = vadd.f32 0.0, %v717
        %v719 = vpop.f32.mrb[0].mxu0
        %v720 = vadd.f32 0.0, %v719
        %v721 = vpop.f32.mrb[0].mxu0
        %v722 = vadd.f32 0.0, %v721
        %723 = vmatprep.mubr.bf16.mxu0 0
        %724 = vmatmul.mubr.bf16.gmra.mrb[0].mxu0 %v520
        %v725 = vpop.f32.mrb[0].mxu0
        %v726 = vadd.f32 0.0, %v725
        %v727 = vpop.f32.mrb[0].mxu0
        %v728 = vadd.f32 0.0, %v727
        %v729 = vpop.f32.mrb[0].mxu0
        %v730 = vadd.f32 0.0, %v729
        %v731 = vpop.f32.mrb[0].mxu0
        %v732 = vadd.f32 0.0, %v731
        %733 = vmatprep.mubr.bf16.mxu0 0
        %734 = vmatmul.mubr.bf16.gmra.mrb[0].mxu0 %v523
        %v735 = vpop.f32.mrb[0].mxu0
        %v736 = vadd.f32 0.0, %v735
        %v737 = vpop.f32.mrb[0].mxu0
        %v738 = vadd.f32 0.0, %v737
        %v739 = vpop.f32.mrb[0].mxu0
        %v740 = vadd.f32 0.0, %v739
        %v741 = vpop.f32.mrb[0].mxu0
        %v742 = vadd.f32 0.0, %v741
        %743 = vdwg.mxu0
        %744 = vmatprep.subr.bf16.mxu0 %v429
        %745 = vmatpush1.bf16.msra.mxu0 %v428
        %746 = vmatprep.subr.bf16.mxu0 %v444
        %747 = vmatpush1.bf16.msra.mxu0 %v443
        %748 = vmatprep.subr.bf16.mxu0 %v459
        %749 = vmatpush1.bf16.msra.mxu0 %v458
        %750 = vmatprep.subr.bf16.mxu0 0
        %751 = vmatpush1.bf16.msra.mxu0 0
        %752 = vmatprep.subr.bf16.mxu0 0
        %753 = vmatpush1.bf16.msra.mxu0 0
        %754 = vmatprep.subr.bf16.mxu0 0
        %755 = vmatpush1.bf16.msra.mxu0 0
        %756 = vmatprep.subr.bf16.mxu0 0
        %757 = vmatpush1.bf16.msra.mxu0 0
        %758 = vmatprep.subr.bf16.mxu0 0
        %759 = vmatpush1.bf16.msra.mxu0 0
        %760 = vmatprep.subr.bf16.mxu0 0
        %761 = vmatpush1.bf16.msra.mxu0 0
        %762 = vmatprep.subr.bf16.mxu0 0
        %763 = vmatpush1.bf16.msra.mxu0 0
        %764 = vmatprep.subr.bf16.mxu0 0
        %765 = vmatpush1.bf16.msra.mxu0 0
        %766 = vmatprep.subr.bf16.mxu0 0
        %767 = vmatpush1.bf16.msra.mxu0 0
        %768 = vmatprep.subr.bf16.mxu0 0
        %769 = vmatpush1.bf16.msra.mxu0 0
        %770 = vmatprep.subr.bf16.mxu0 0
        %771 = vmatpush1.bf16.msra.mxu0 0
        %772 = vmatprep.subr.bf16.mxu0 0
        %773 = vmatpush1.bf16.msra.mxu0 0
        %774 = vmatprep.subr.bf16.mxu0 0
        %775 = vmatpush1.bf16.msra.mxu0 0
        %776 = vmatprep.mubr.bf16.mxu0 0
        %777 = vmatmul.mubr.bf16.gmra.mrb[0].mxu0 %v514
        %v778 = vpop.f32.mrb[0].mxu0
        %v779 = vadd.f32 0.0, %v778
        %v780 = vpop.f32.mrb[0].mxu0
        %v781 = vadd.f32 0.0, %v780
        %v782 = vpop.f32.mrb[0].mxu0
        %v783 = vadd.f32 0.0, %v782
        %v784 = vpop.f32.mrb[0].mxu0
        %v785 = vadd.f32 0.0, %v784
        %786 = vmatprep.mubr.bf16.mxu0 0
        %787 = vmatmul.mubr.bf16.gmra.mrb[0].mxu0 %v517
        %v788 = vpop.f32.mrb[0].mxu0
        %v789 = vadd.f32 0.0, %v788
        %v790 = vpop.f32.mrb[0].mxu0
        %v791 = vadd.f32 0.0, %v790
        %v792 = vpop.f32.mrb[0].mxu0
        %v793 = vadd.f32 0.0, %v792
        %v794 = vpop.f32.mrb[0].mxu0
        %v795 = vadd.f32 0.0, %v794
        %796 = vmatprep.mubr.bf16.mxu0 0
        %797 = vmatmul.mubr.bf16.gmra.mrb[0].mxu0 %v520
        %v798 = vpop.f32.mrb[0].mxu0
        %v799 = vadd.f32 0.0, %v798
        %v800 = vpop.f32.mrb[0].mxu0
        %v801 = vadd.f32 0.0, %v800
        %v802 = vpop.f32.mrb[0].mxu0
        %v803 = vadd.f32 0.0, %v802
        %v804 = vpop.f32.mrb[0].mxu0
        %v805 = vadd.f32 0.0, %v804
        %806 = vmatprep.mubr.bf16.mxu0 0
        %807 = vmatmul.mubr.bf16.gmra.mrb[0].mxu0 %v523
        %v808 = vpop.f32.mrb[0].mxu0
        %v809 = vadd.f32 0.0, %v808
        %v810 = vpop.f32.mrb[0].mxu0
        %v811 = vadd.f32 0.0, %v810
        %v812 = vpop.f32.mrb[0].mxu0
        %v813 = vadd.f32 0.0, %v812
        %v814 = vpop.f32.mrb[0].mxu0
        %v815 = vadd.f32 0.0, %v814
        %816 = vdwg.mxu0
        %817 = vmatprep.subr.bf16.mxu0 %v431
        %818 = vmatpush1.bf16.msra.mxu0 %v430
        %819 = vmatprep.subr.bf16.mxu0 %v446
        %820 = vmatpush1.bf16.msra.mxu0 %v445
        %821 = vmatprep.subr.bf16.mxu0 %v461
        %822 = vmatpush1.bf16.msra.mxu0 %v460
        %823 = vmatprep.subr.bf16.mxu0 0
        %824 = vmatpush1.bf16.msra.mxu0 0
        %825 = vmatprep.subr.bf16.mxu0 0
        %826 = vmatpush1.bf16.msra.mxu0 0
        %827 = vmatprep.subr.bf16.mxu0 0
        %828 = vmatpush1.bf16.msra.mxu0 0
        %829 = vmatprep.subr.bf16.mxu0 0
        %830 = vmatpush1.bf16.msra.mxu0 0
        %831 = vmatprep.subr.bf16.mxu0 0
        %832 = vmatpush1.bf16.msra.mxu0 0
        %833 = vmatprep.subr.bf16.mxu0 0
        %834 = vmatpush1.bf16.msra.mxu0 0
        %835 = vmatprep.subr.bf16.mxu0 0
        %836 = vmatpush1.bf16.msra.mxu0 0
        %837 = vmatprep.subr.bf16.mxu0 0
        %838 = vmatpush1.bf16.msra.mxu0 0
        %839 = vmatprep.subr.bf16.mxu0 0
        %840 = vmatpush1.bf16.msra.mxu0 0
        %841 = vmatprep.subr.bf16.mxu0 0
        %842 = vmatpush1.bf16.msra.mxu0 0
        %843 = vmatprep.subr.bf16.mxu0 0
        %844 = vmatpush1.bf16.msra.mxu0 0
        %845 = vmatprep.subr.bf16.mxu0 0
        %846 = vmatpush1.bf16.msra.mxu0 0
        %847 = vmatprep.subr.bf16.mxu0 0
        %848 = vmatpush1.bf16.msra.mxu0 0
        %849 = vmatprep.mubr.bf16.mxu0 0
        %850 = vmatmul.mubr.bf16.gmra.mrb[0].mxu0 %v514
        %v851 = vpop.f32.mrb[0].mxu0
        %v852 = vadd.f32 0.0, %v851
        %v853 = vpop.f32.mrb[0].mxu0
        %v854 = vadd.f32 0.0, %v853
        %v855 = vpop.f32.mrb[0].mxu0
        %v856 = vadd.f32 0.0, %v855
        %v857 = vpop.f32.mrb[0].mxu0
        %v858 = vadd.f32 0.0, %v857
        %859 = vmatprep.mubr.bf16.mxu0 0
        %860 = vmatmul.mubr.bf16.gmra.mrb[0].mxu0 %v517
        %v861 = vpop.f32.mrb[0].mxu0
        %v862 = vadd.f32 0.0, %v861
        %v863 = vpop.f32.mrb[0].mxu0
        %v864 = vadd.f32 0.0, %v863
        %v865 = vpop.f32.mrb[0].mxu0
        %v866 = vadd.f32 0.0, %v865
        %v867 = vpop.f32.mrb[0].mxu0
        %v868 = vadd.f32 0.0, %v867
        %869 = vmatprep.mubr.bf16.mxu0 0
        %870 = vmatmul.mubr.bf16.gmra.mrb[0].mxu0 %v520
        %v871 = vpop.f32.mrb[0].mxu0
        %v872 = vadd.f32 0.0, %v871
        %v873 = vpop.f32.mrb[0].mxu0
        %v874 = vadd.f32 0.0, %v873
        %v875 = vpop.f32.mrb[0].mxu0
        %v876 = vadd.f32 0.0, %v875
        %v877 = vpop.f32.mrb[0].mxu0
        %v878 = vadd.f32 0.0, %v877
        %879 = vmatprep.mubr.bf16.mxu0 0
        %880 = vmatmul.mubr.bf16.gmra.mrb[0].mxu0 %v523
        %v881 = vpop.f32.mrb[0].mxu0
        %v882 = vadd.f32 0.0, %v881
        %v883 = vpop.f32.mrb[0].mxu0
        %v884 = vadd.f32 0.0, %v883
        %v885 = vpop.f32.mrb[0].mxu0
        %v886 = vadd.f32 0.0, %v885
        %v887 = vpop.f32.mrb[0].mxu0
        %v888 = vadd.f32 0.0, %v887
        %889 = vdwg.mxu0
        %890 = vmatprep.subr.bf16.mxu0 %v433
        %891 = vmatpush1.bf16.msra.mxu0 %v432
        %892 = vmatprep.subr.bf16.mxu0 %v448
        %893 = vmatpush1.bf16.msra.mxu0 %v447
        %894 = vmatprep.subr.bf16.mxu0 %v463
        %895 = vmatpush1.bf16.msra.mxu0 %v462
        %896 = vmatprep.subr.bf16.mxu0 0
        %897 = vmatpush1.bf16.msra.mxu0 0
        %898 = vmatprep.subr.bf16.mxu0 0
        %899 = vmatpush1.bf16.msra.mxu0 0
        %900 = vmatprep.subr.bf16.mxu0 0
        %901 = vmatpush1.bf16.msra.mxu0 0
        %902 = vmatprep.subr.bf16.mxu0 0
        %903 = vmatpush1.bf16.msra.mxu0 0
        %904 = vmatprep.subr.bf16.mxu0 0
        %905 = vmatpush1.bf16.msra.mxu0 0
        %906 = vmatprep.subr.bf16.mxu0 0
        %907 = vmatpush1.bf16.msra.mxu0 0
        %908 = vmatprep.subr.bf16.mxu0 0
        %909 = vmatpush1.bf16.msra.mxu0 0
        %910 = vmatprep.subr.bf16.mxu0 0
        %911 = vmatpush1.bf16.msra.mxu0 0
        %912 = vmatprep.subr.bf16.mxu0 0
        %913 = vmatpush1.bf16.msra.mxu0 0
        %914 = vmatprep.subr.bf16.mxu0 0
        %915 = vmatpush1.bf16.msra.mxu0 0
        %916 = vmatprep.subr.bf16.mxu0 0
        %917 = vmatpush1.bf16.msra.mxu0 0
        %918 = vmatprep.subr.bf16.mxu0 0
        %919 = vmatpush1.bf16.msra.mxu0 0
        %920 = vmatprep.subr.bf16.mxu0 0
        %921 = vmatpush1.bf16.msra.mxu0 0
        %922 = vmatprep.mubr.bf16.mxu0 0
        %923 = vmatmul.mubr.bf16.gmra.mrb[0].mxu0 %v514
        %v924 = vpop.f32.mrb[0].mxu0
        %v925 = vadd.f32 0.0, %v924
        %v926 = vpop.f32.mrb[0].mxu0
        %v927 = vadd.f32 0.0, %v926
        %v928 = vpop.f32.mrb[0].mxu0
        %v929 = vadd.f32 0.0, %v928
        %v930 = vpop.f32.mrb[0].mxu0
        %v931 = vadd.f32 0.0, %v930
        %932 = vmatprep.mubr.bf16.mxu0 0
        %933 = vmatmul.mubr.bf16.gmra.mrb[0].mxu0 %v517
        %v934 = vpop.f32.mrb[0].mxu0
        %v935 = vadd.f32 0.0, %v934
        %v936 = vpop.f32.mrb[0].mxu0
        %v937 = vadd.f32 0.0, %v936
        %v938 = vpop.f32.mrb[0].mxu0
        %v939 = vadd.f32 0.0, %v938
        %v940 = vpop.f32.mrb[0].mxu0
        %v941 = vadd.f32 0.0, %v940
        %942 = vmatprep.mubr.bf16.mxu0 0
        %943 = vmatmul.mubr.bf16.gmra.mrb[0].mxu0 %v520
        %v944 = vpop.f32.mrb[0].mxu0
        %v945 = vadd.f32 0.0, %v944
        %v946 = vpop.f32.mrb[0].mxu0
        %v947 = vadd.f32 0.0, %v946
        %v948 = vpop.f32.mrb[0].mxu0
        %v949 = vadd.f32 0.0, %v948
        %v950 = vpop.f32.mrb[0].mxu0
        %v951 = vadd.f32 0.0, %v950
        %952 = vmatprep.mubr.bf16.mxu0 0
        %953 = vmatmul.mubr.bf16.gmra.mrb[0].mxu0 %v523
        %v954 = vpop.f32.mrb[0].mxu0
        %v955 = vadd.f32 0.0, %v954
        %v956 = vpop.f32.mrb[0].mxu0
        %v957 = vadd.f32 0.0, %v956
        %v958 = vpop.f32.mrb[0].mxu0
        %v959 = vadd.f32 0.0, %v958
        %v960 = vpop.f32.mrb[0].mxu0
        %v961 = vadd.f32 0.0, %v960
        %962 = vdwg.mxu0
        %963 = vmatprep.subr.bf16.mxu0 %v435
        %964 = vmatpush1.bf16.msra.mxu0 %v434
        %965 = vmatprep.subr.bf16.mxu0 %v450
        %966 = vmatpush1.bf16.msra.mxu0 %v449
        %967 = vmatprep.subr.bf16.mxu0 %v465
        %968 = vmatpush1.bf16.msra.mxu0 %v464
        %969 = vmatprep.subr.bf16.mxu0 0
        %970 = vmatpush1.bf16.msra.mxu0 0
        %971 = vmatprep.subr.bf16.mxu0 0
        %972 = vmatpush1.bf16.msra.mxu0 0
        %973 = vmatprep.subr.bf16.mxu0 0
        %974 = vmatpush1.bf16.msra.mxu0 0
        %975 = vmatprep.subr.bf16.mxu0 0
        %976 = vmatpush1.bf16.msra.mxu0 0
        %977 = vmatprep.subr.bf16.mxu0 0
        %978 = vmatpush1.bf16.msra.mxu0 0
        %979 = vmatprep.subr.bf16.mxu0 0
        %980 = vmatpush1.bf16.msra.mxu0 0
        %981 = vmatprep.subr.bf16.mxu0 0
        %982 = vmatpush1.bf16.msra.mxu0 0
        %983 = vmatprep.subr.bf16.mxu0 0
        %984 = vmatpush1.bf16.msra.mxu0 0
        %985 = vmatprep.subr.bf16.mxu0 0
        %986 = vmatpush1.bf16.msra.mxu0 0
        %987 = vmatprep.subr.bf16.mxu0 0
        %988 = vmatpush1.bf16.msra.mxu0 0
        %989 = vmatprep.subr.bf16.mxu0 0
        %990 = vmatpush1.bf16.msra.mxu0 0
        %991 = vmatprep.subr.bf16.mxu0 0
        %992 = vmatpush1.bf16.msra.mxu0 0
        %993 = vmatprep.subr.bf16.mxu0 0
        %994 = vmatpush1.bf16.msra.mxu0 0
        %995 = vmatprep.mubr.bf16.mxu0 0
        %996 = vmatmul.mubr.bf16.gmra.mrb[0].mxu0 %v514
        %v997 = vpop.f32.mrb[0].mxu0
        %v998 = vadd.f32 0.0, %v997
        %v999 = vpop.f32.mrb[0].mxu0
        %v1000 = vadd.f32 0.0, %v999
        %v1001 = vpop.f32.mrb[0].mxu0
        %v1002 = vadd.f32 0.0, %v1001
        %v1003 = vpop.f32.mrb[0].mxu0
        %v1004 = vadd.f32 0.0, %v1003
        %1005 = vmatprep.mubr.bf16.mxu0 0
        %1006 = vmatmul.mubr.bf16.gmra.mrb[0].mxu0 %v517
        %v1007 = vpop.f32.mrb[0].mxu0
        %v1008 = vadd.f32 0.0, %v1007
        %v1009 = vpop.f32.mrb[0].mxu0
        %v1010 = vadd.f32 0.0, %v1009
        %v1011 = vpop.f32.mrb[0].mxu0
        %v1012 = vadd.f32 0.0, %v1011
        %v1013 = vpop.f32.mrb[0].mxu0
        %v1014 = vadd.f32 0.0, %v1013
        %1015 = vmatprep.mubr.bf16.mxu0 0
        %1016 = vmatmul.mubr.bf16.gmra.mrb[0].mxu0 %v520
        %v1017 = vpop.f32.mrb[0].mxu0
        %v1018 = vadd.f32 0.0, %v1017
        %v1019 = vpop.f32.mrb[0].mxu0
        %v1020 = vadd.f32 0.0, %v1019
        %v1021 = vpop.f32.mrb[0].mxu0
        %v1022 = vadd.f32 0.0, %v1021
        %v1023 = vpop.f32.mrb[0].mxu0
        %v1024 = vadd.f32 0.0, %v1023
        %1025 = vmatprep.mubr.bf16.mxu0 0
        %1026 = vmatmul.mubr.bf16.gmra.mrb[0].mxu0 %v523
        %v1027 = vpop.f32.mrb[0].mxu0
        %v1028 = vadd.f32 0.0, %v1027
        %v1029 = vpop.f32.mrb[0].mxu0
        %v1030 = vadd.f32 0.0, %v1029
        %v1031 = vpop.f32.mrb[0].mxu0
        %v1032 = vadd.f32 0.0, %v1031
        %v1033 = vpop.f32.mrb[0].mxu0
        %v1034 = vadd.f32 0.0, %v1033
        %1035 = vdwg.mxu0
        %1036 = vmatprep.subr.bf16.mxu0 0
        %1037 = vmatpush1.bf16.msra.mxu0 %v436
        %1038 = vmatprep.subr.bf16.mxu0 0
        %1039 = vmatpush1.bf16.msra.mxu0 %v451
        %1040 = vmatprep.subr.bf16.mxu0 0
        %1041 = vmatpush1.bf16.msra.mxu0 %v466
        %1042 = vmatprep.subr.bf16.mxu0 0
        %1043 = vmatpush1.bf16.msra.mxu0 0
        %1044 = vmatprep.subr.bf16.mxu0 0
        %1045 = vmatpush1.bf16.msra.mxu0 0
        %1046 = vmatprep.subr.bf16.mxu0 0
        %1047 = vmatpush1.bf16.msra.mxu0 0
        %1048 = vmatprep.subr.bf16.mxu0 0
        %1049 = vmatpush1.bf16.msra.mxu0 0
        %1050 = vmatprep.subr.bf16.mxu0 0
        %1051 = vmatpush1.bf16.msra.mxu0 0
        %1052 = vmatprep.subr.bf16.mxu0 0
        %1053 = vmatpush1.bf16.msra.mxu0 0
        %1054 = vmatprep.subr.bf16.mxu0 0
        %1055 = vmatpush1.bf16.msra.mxu0 0
        %1056 = vmatprep.subr.bf16.mxu0 0
        %1057 = vmatpush1.bf16.msra.mxu0 0
        %1058 = vmatprep.subr.bf16.mxu0 0
        %1059 = vmatpush1.bf16.msra.mxu0 0
        %1060 = vmatprep.subr.bf16.mxu0 0
        %1061 = vmatpush1.bf16.msra.mxu0 0
        %1062 = vmatprep.subr.bf16.mxu0 0
        %1063 = vmatpush1.bf16.msra.mxu0 0
        %1064 = vmatprep.subr.bf16.mxu0 0
        %1065 = vmatpush1.bf16.msra.mxu0 0
        %1066 = vmatprep.subr.bf16.mxu0 0
        %1067 = vmatpush1.bf16.msra.mxu0 0
        %1068 = vmatprep.mubr.bf16.mxu0 0
        %1069 = vmatmul.mubr.bf16.gmra.mrb[0].mxu0 %v514
        %v1070 = vpop.f32.mrb[0].mxu0
        %v1071 = vadd.f32 0.0, %v1070
        %v1072 = vpop.f32.mrb[0].mxu0
        %v1073 = vpop.f32.mrb[0].mxu0
        %v1074 = vadd.f32 0.0, %v1073
        %v1075 = vpop.f32.mrb[0].mxu0
        %1076 = vmatprep.mubr.bf16.mxu0 0
        %1077 = vmatmul.mubr.bf16.gmra.mrb[0].mxu0 %v517
        %v1078 = vpop.f32.mrb[0].mxu0
        %v1079 = vadd.f32 0.0, %v1078
        %v1080 = vpop.f32.mrb[0].mxu0
        %v1081 = vpop.f32.mrb[0].mxu0
        %v1082 = vadd.f32 0.0, %v1081
        %v1083 = vpop.f32.mrb[0].mxu0
        %1084 = vmatprep.mubr.bf16.mxu0 0
        %1085 = vmatmul.mubr.bf16.gmra.mrb[0].mxu0 %v520
        %v1086 = vpop.f32.mrb[0].mxu0
        %v1087 = vadd.f32 0.0, %v1086
        %v1088 = vpop.f32.mrb[0].mxu0
        %v1089 = vpop.f32.mrb[0].mxu0
        %v1090 = vadd.f32 0.0, %v1089
        %v1091 = vpop.f32.mrb[0].mxu0
        %1092 = vmatprep.mubr.bf16.mxu0 0
        %1093 = vmatmul.mubr.bf16.gmra.mrb[0].mxu0 %v523
        %v1094 = vpop.f32.mrb[0].mxu0
        %v1095 = vadd.f32 0.0, %v1094
        %v1096 = vpop.f32.mrb[0].mxu0
        %v1097 = vpop.f32.mrb[0].mxu0
        %v1098 = vadd.f32 0.0, %v1097
        %v1099 = vpop.f32.mrb[0].mxu0
        %1100 = vdwg.mxu0
        %v1101 = vmax.f32 %v560, %v570
        %v1102 = vmax.f32 %v562, %v572
        %v1103 = vmax.f32 %v633, %v643
        %v1104 = vmax.f32 %v635, %v645
        %v1105 = vmax.f32 %v706, %v716
        %v1106 = vmax.f32 %v708, %v718
        %v1107 = vmax.f32 %v779, %v789
        %v1108 = vmax.f32 %v781, %v791
        %v1109 = vmax.f32 %v852, %v862
        %v1110 = vmax.f32 %v854, %v864
        %v1111 = vmax.f32 %v925, %v935
        %v1112 = vmax.f32 %v927, %v937
        %v1113 = vmax.f32 %v998, %v1008
        %v1114 = vmax.f32 %v1000, %v1010
        %v1115 = vmax.f32 %v1071, %v1079
        %v1116 = vmax.f32 %v564, %v574
        %v1117 = vmax.f32 %v566, %v576
        %v1118 = vmax.f32 %v637, %v647
        %v1119 = vmax.f32 %v639, %v649
        %v1120 = vmax.f32 %v710, %v720
        %v1121 = vmax.f32 %v712, %v722
        %v1122 = vmax.f32 %v783, %v793
        %v1123 = vmax.f32 %v785, %v795
        %v1124 = vmax.f32 %v856, %v866
        %v1125 = vmax.f32 %v858, %v868
        %v1126 = vmax.f32 %v929, %v939
        %v1127 = vmax.f32 %v931, %v941
        %v1128 = vmax.f32 %v1002, %v1012
        %v1129 = vmax.f32 %v1004, %v1014
        %v1130 = vmax.f32 %v1074, %v1082
        %v1131 = vmax.f32 %v580, %v590
        %v1132 = vmax.f32 %v582, %v592
        %v1133 = vmax.f32 %v653, %v663
        %v1134 = vmax.f32 %v655, %v665
        %v1135 = vmax.f32 %v726, %v736
        %v1136 = vmax.f32 %v728, %v738
        %v1137 = vmax.f32 %v799, %v809
        %v1138 = vmax.f32 %v801, %v811
        %v1139 = vmax.f32 %v872, %v882
        %v1140 = vmax.f32 %v874, %v884
        %v1141 = vmax.f32 %v945, %v955
        %v1142 = vmax.f32 %v947, %v957
        %v1143 = vmax.f32 %v1018, %v1028
        %v1144 = vmax.f32 %v1020, %v1030
        %v1145 = vmax.f32 %v1087, %v1095
        %v1146 = vmax.f32 %v584, %v594
        %v1147 = vmax.f32 %v586, %v596
        %v1148 = vmax.f32 %v657, %v667
        %v1149 = vmax.f32 %v659, %v669
        %v1150 = vmax.f32 %v730, %v740
        %v1151 = vmax.f32 %v732, %v742
        %v1152 = vmax.f32 %v803, %v813
        %v1153 = vmax.f32 %v805, %v815
        %v1154 = vmax.f32 %v876, %v886
        %v1155 = vmax.f32 %v878, %v888
        %v1156 = vmax.f32 %v949, %v959
        %v1157 = vmax.f32 %v951, %v961
        %v1158 = vmax.f32 %v1022, %v1032
        %v1159 = vmax.f32 %v1024, %v1034
        %v1160 = vmax.f32 %v1090, %v1098
        %v1161 = vmax.f32 %v1101, %v1131
        %v1162 = vmax.f32 %v1102, %v1132
        %v1163 = vmax.f32 %v1103, %v1133
        %v1164 = vmax.f32 %v1104, %v1134
        %v1165 = vmax.f32 %v1105, %v1135
        %v1166 = vmax.f32 %v1106, %v1136
        %v1167 = vmax.f32 %v1107, %v1137
        %v1168 = vmax.f32 %v1108, %v1138
        %v1169 = vmax.f32 %v1109, %v1139
        %v1170 = vmax.f32 %v1110, %v1140
        %v1171 = vmax.f32 %v1111, %v1141
        %v1172 = vmax.f32 %v1112, %v1142
        %v1173 = vmax.f32 %v1113, %v1143
        %v1174 = vmax.f32 %v1114, %v1144
        %v1175 = vmax.f32 %v1115, %v1145
        %v1176 = vmax.f32 %v1116, %v1146
        %v1177 = vmax.f32 %v1117, %v1147
        %v1178 = vmax.f32 %v1118, %v1148
        %v1179 = vmax.f32 %v1119, %v1149
        %v1180 = vmax.f32 %v1120, %v1150
        %v1181 = vmax.f32 %v1121, %v1151
        %v1182 = vmax.f32 %v1122, %v1152
        %v1183 = vmax.f32 %v1123, %v1153
        %v1184 = vmax.f32 %v1124, %v1154
        %v1185 = vmax.f32 %v1125, %v1155
        %v1186 = vmax.f32 %v1126, %v1156
        %v1187 = vmax.f32 %v1127, %v1157
        %v1188 = vmax.f32 %v1128, %v1158
        %v1189 = vmax.f32 %v1129, %v1159
        %v1190 = vmax.f32 %v1130, %v1160
        %v1191 = vld [vmem:[%s2] sm:$0xff]
        %v1192 = vld [vmem:[%s2 + $0x8] sm:$0xff]
        %1194 = vset.pattern.permute.xlu0 0
        %1195 = vperm.xlu0 %1194, %v1191
        %v1196 = vpop.permute.xlu0 %1195
        %1199 = vset.pattern.permute.xlu0 0
        %1200 = vperm.xlu0 %1199, %v1192
        %v1201 = vpop.permute.xlu0 %1200
        %v1203 = vadd.f32 %v1161, %v1196
        %v1204 = vadd.f32 %v1162, %v1196
        %v1205 = vadd.f32 %v1163, %v1196
        %v1206 = vadd.f32 %v1164, %v1196
        %v1207 = vadd.f32 %v1165, %v1196
        %v1208 = vadd.f32 %v1166, %v1196
        %v1209 = vadd.f32 %v1167, %v1196
        %v1210 = vadd.f32 %v1168, %v1196
        %v1211 = vadd.f32 %v1169, %v1196
        %v1212 = vadd.f32 %v1170, %v1196
        %v1213 = vadd.f32 %v1171, %v1196
        %v1214 = vadd.f32 %v1172, %v1196
        %v1215 = vadd.f32 %v1173, %v1196
        %v1216 = vadd.f32 %v1174, %v1196
        %v1217 = vadd.f32 %v1175, %v1196
        %v1218 = vadd.f32 %v1176, %v1201
        %v1219 = vadd.f32 %v1177, %v1201
        %v1220 = vadd.f32 %v1178, %v1201
        %v1221 = vadd.f32 %v1179, %v1201
        %v1222 = vadd.f32 %v1180, %v1201
        %v1223 = vadd.f32 %v1181, %v1201
        %v1224 = vadd.f32 %v1182, %v1201
        %v1225 = vadd.f32 %v1183, %v1201
        %v1226 = vadd.f32 %v1184, %v1201
        %v1227 = vadd.f32 %v1185, %v1201
        %v1228 = vadd.f32 %v1186, %v1201
        %v1229 = vadd.f32 %v1187, %v1201
        %v1230 = vadd.f32 %v1188, %v1201
        %v1231 = vadd.f32 %v1189, %v1201
        %v1232 = vadd.f32 %v1190, %v1201
        %v1233 = vmax.f32 %v1203, 0.0
        %v1234 = vmax.f32 %v1204, 0.0
        %v1235 = vmax.f32 %v1205, 0.0
        %v1236 = vmax.f32 %v1206, 0.0
        %v1237 = vmax.f32 %v1207, 0.0
        %v1238 = vmax.f32 %v1208, 0.0
        %v1239 = vmax.f32 %v1209, 0.0
        %v1240 = vmax.f32 %v1210, 0.0
        %v1241 = vmax.f32 %v1211, 0.0
        %v1242 = vmax.f32 %v1212, 0.0
        %v1243 = vmax.f32 %v1213, 0.0
        %v1244 = vmax.f32 %v1214, 0.0
        %v1245 = vmax.f32 %v1215, 0.0
        %v1246 = vmax.f32 %v1216, 0.0
        %v1247 = vmax.f32 %v1217, 0.0
        %v1248 = vmax.f32 %v1218, 0.0
        %v1249 = vmax.f32 %v1219, 0.0
        %v1250 = vmax.f32 %v1220, 0.0
        %v1251 = vmax.f32 %v1221, 0.0
        %v1252 = vmax.f32 %v1222, 0.0
        %v1253 = vmax.f32 %v1223, 0.0
        %v1254 = vmax.f32 %v1224, 0.0
        %v1255 = vmax.f32 %v1225, 0.0
        %v1256 = vmax.f32 %v1226, 0.0
        %v1257 = vmax.f32 %v1227, 0.0
        %v1258 = vmax.f32 %v1228, 0.0
        %v1259 = vmax.f32 %v1229, 0.0
        %v1260 = vmax.f32 %v1230, 0.0
        %v1261 = vmax.f32 %v1231, 0.0
        %v1262 = vmax.f32 %v1232, 0.0
        %1263 = vst [vmem:[%s206] sm:$0xff] %v1233
        %1264 = vst [vmem:[%s206 + $0x8] sm:$0xff] %v1234
        %1265 = vst [vmem:[%s206 + $0x10] sm:$0xff] %v1235
        %1266 = vst [vmem:[%s206 + $0x18] sm:$0xff] %v1236
        %1267 = vst [vmem:[%s206 + $0x20] sm:$0xff] %v1237
        %1268 = vst [vmem:[%s206 + $0x28] sm:$0xff] %v1238
        %1269 = vst [vmem:[%s206 + $0x30] sm:$0xff] %v1239
        %1270 = vst [vmem:[%s206 + $0x38] sm:$0xff] %v1240
        %1271 = vst [vmem:[%s206 + $0x40] sm:$0xff] %v1241
        %1272 = vst [vmem:[%s206 + $0x48] sm:$0xff] %v1242
        %1273 = vst [vmem:[%s206 + $0x50] sm:$0xff] %v1243
        %1274 = vst [vmem:[%s206 + $0x58] sm:$0xff] %v1244
        %1275 = vst [vmem:[%s206 + $0x60] sm:$0xff] %v1245
        %1276 = vst [vmem:[%s206 + $0x68] sm:$0xff] %v1246
        %vm1277 = vcmask 678912
        %1278 = vst.msk [vmem:[%s206 + $0x70] sm:$0xff] %vm1277, %v1247
        %1279 = vst [vmem:[%s206 + $0x78] sm:$0xff] %v1248
        %1280 = vst [vmem:[%s206 + $0x80] sm:$0xff] %v1249
        %1281 = vst [vmem:[%s206 + $0x88] sm:$0xff] %v1250
        %1282 = vst [vmem:[%s206 + $0x90] sm:$0xff] %v1251
        %1283 = vst [vmem:[%s206 + $0x98] sm:$0xff] %v1252
        %1284 = vst [vmem:[%s206 + $0xa0] sm:$0xff] %v1253
        %1285 = vst [vmem:[%s206 + $0xa8] sm:$0xff] %v1254
        %1286 = vst [vmem:[%s206 + $0xb0] sm:$0xff] %v1255
        %1287 = vst [vmem:[%s206 + $0xb8] sm:$0xff] %v1256
        %1288 = vst [vmem:[%s206 + $0xc0] sm:$0xff] %v1257
        %1289 = vst [vmem:[%s206 + $0xc8] sm:$0xff] %v1258
        %1290 = vst [vmem:[%s206 + $0xd0] sm:$0xff] %v1259
        %1291 = vst [vmem:[%s206 + $0xd8] sm:$0xff] %v1260
        %1292 = vst [vmem:[%s206 + $0xe0] sm:$0xff] %v1261
        %1293 = vst.msk [vmem:[%s206 + $0xe8] sm:$0xff] %vm1277, %v1262
        %s1294 = sand.u32 %s112, 1
        %s1295 = scalar_lea.sflag [#allocation4], %s1294
        %s1296 = sand.u32 %s112, 1
        %s1297 = smul.addr %s1296, 240
        %s1298 = scalar_lea.vmem [#allocation5], %s1297
        // Predicated region
        $region37: #{tpu_custom_call.1} parent=31 // pred_check
          %p1299 = pneg %p122
        $region38: #{tpu_custom_call.1} parent=31 // pred_check_branch
          %1301 = sbr.rel (%p1299) target = $region40
        $region39: #{tpu_custom_call.1} parent=31 // pred_region
          %s1303 = ssub.s32 3840, 3840
          %1304 = vsyncadd %s1295, %s1303
          %s1305 = smul.addr %s25, 30
          %s1306 = smul.addr %s24, 90
          %s1307 = sadd.s32 %s1305, %s1306
          %s1308 = smul.addr %s1307, 128
          %s1309 = scalar_lea.hbm %s3, %s1308
          %s1310 = sshll.u32 %s1298, 4
          %s1311 = int_to_ptr.vmem [resolvable:$true] %s1310
          %1316 = dma.vmem_to_hbm [thread:$0]  %s1311, 3840, %s1309, %s1295, 1920, 1920, 120
        $region40: #{tpu_custom_call.1} parent=31 // pred_fallthru
          _
      $region32: #{tpu_custom_call.1} parent=5 // pred_fallthru
        _
      %p1317 = scmp.le.s32.totalorder 2, %s15
      // Predicated region
      $region41: #{tpu_custom_call.1} parent=5 // pred_check
        %p1318 = pneg %p1317
      $region42: #{tpu_custom_call.1} parent=5 // pred_check_branch
        %1320 = sbr.rel (%p1318) target = $region44
      $region43: #{tpu_custom_call.1} parent=5 // pred_region
        %s1321 = ssub.s32 %s15, 2
        // Predicated region
        $region45: #{tpu_custom_call.1} parent=43 // pred_check
          %p1322 = pneg %p128
        $region46: #{tpu_custom_call.1} parent=43 // pred_check_branch
          %1324 = sbr.rel (%p1322) target = $region48
        $region47: #{tpu_custom_call.1} parent=43 // pred_region
          %s1325 = sand.u32 %s113, 1
          %s1326 = scalar_lea.sflag [#allocation4], %s1325
          %s1327 = sand.u32 %s113, 1
          %s1328 = smul.addr %s1327, 240
          %s1329 = scalar_lea.vmem [#allocation5], %s1328
          %1330 = dma.done %s1326, 3840
        $region48: #{tpu_custom_call.1} parent=43 // pred_fallthru
          _
      $region44: #{tpu_custom_call.1} parent=5 // pred_fallthru
        _
    $region6: #{tpu_custom_call.1} parent=1 // loop_footer
      %s19 = sadd.s32 1, %s15
    $region7: #{tpu_custom_call.1} parent=1 // loop_footer_branch
      %14 = sbr.rel target = $region3
    $region8: #{tpu_custom_call.1} parent=1 // loop_exit
      _
    %1331 = vsyncpa [#allocation3], 1
    %s1332 = scalar_lea.sflag [#allocation3], 1
    %1333 = vsyncpa %s1332, 1
    %1334 = vsyncpa [#allocation4], 1
    %s1335 = scalar_lea.sflag [#allocation4], 1
    %1336 = vsyncpa %s1335, 1

</llo_original>
